<compile_context>
chip_gen: v7x
topology: tpu7x:2x2x1
jax: 0.10.0
libtpu: 0.0.40
codegen_flags: <defaults>
</compile_context>

<pallas_src>
import jax
import jax.numpy as jnp
from jax.experimental import pallas as pl
from jax.experimental.pallas import tpu as pltpu

IN_FEATURES = 784
OUT_FEATURES = 1


def _round_up(x: int, m: int) -> int:
    return ((x + m - 1) // m) * m


def linear_kernel(x_ref, w_ref, b_ref, o_ref):
    # x_ref: (TB, 784) VMEM (f32 or bf16)   w_ref: (1, 784) f32 VMEM (resident)
    # b_ref: (1, 1)  f32 SMEM scalar        o_ref: (TB, 1) VMEM
    x = x_ref[...].astype(jnp.float32)   # f32 accumulate (v5e has no bf16 VPU)
    w = w_ref[...]                       # (1, 784), broadcasts over the TB rows
    # VPU elementwise multiply + XLU cross-lane reduce; MXU stays idle (the
    # kernel is HBM-bound and a (TB,784)x(784,1) matmul uses 1/128 of the MXU).
    acc = jnp.sum(x * w, axis=-1, keepdims=True)             # (TB, 1) f32
    o_ref[...] = (acc + b_ref[0, 0]).astype(o_ref.dtype)


def linear_forward(x, w, b, *, tb: int = 2048):
    """y = x @ w.T + b, equivalent to torch.nn.Linear(784, 1).forward(x).

    x: (B, 784) f32/bf16;  w: (1, 784) f32 (PyTorch layout);  b: (1,) f32.
    tb: max rows per tile.  2048 is a safe cross-generation default; use 4096
        on v7x if the batch is large enough to keep grid_n >= 2.
    """
    B, F = x.shape
    assert F == IN_FEATURES, f"expected {IN_FEATURES} input features, got {F}"

    tb = _round_up(max(int(tb), 8), 8)

    # ---- tile-size selection (no padding of x; last block may be ragged) ----
    TB = min(tb, _round_up(B, 8))
    if B > TB:
        # Split into equal-sized tiles: keeps grid_n >= 2 (both v7x TCs busy)
        # and balances the ragged tail instead of leaving one tiny block.
        ntiles = pl.cdiv(B, TB)
        TB = _round_up(pl.cdiv(B, ntiles), 8)
    grid_n = pl.cdiv(B, TB)

    b2d = jnp.reshape(b, (1, OUT_FEATURES)).astype(jnp.float32)
    w2d = jnp.reshape(w, (OUT_FEATURES, IN_FEATURES)).astype(jnp.float32)

    # VMEM budget: double-buffered x blocks (784 lane-pads to 896) + output
    # column blocks (1 lane-pads to 128) + resident weight, plus headroom.
    x_buf = TB * _round_up(IN_FEATURES, 128) * 4
    o_buf = TB * 128 * 4
    vmem_limit = 2 * (x_buf + o_buf) + (8 << 20)

    cost = pl.CostEstimate(
        flops=2 * B * IN_FEATURES,
        transcendentals=0,
        bytes_accessed=B * IN_FEATURES * x.dtype.itemsize
        + IN_FEATURES * 4 + 4 + B * 4,
    )

    y = pl.pallas_call(
        linear_kernel,
        out_shape=jax.ShapeDtypeStruct((B, OUT_FEATURES), x.dtype),
        grid_spec=pltpu.PrefetchScalarGridSpec(
            num_scalar_prefetch=0,
            grid=(grid_n,),
            in_specs=[
                # X: one (TB, 784) tile per grid step -> double-buffered
                # pipeline; the last (ragged) block's DMA is clamped by Pallas.
                pl.BlockSpec((TB, IN_FEATURES), lambda i: (i, 0)),
                # Weight row: same block every step -> resident in VMEM.
                pl.BlockSpec((1, IN_FEATURES), lambda i: (0, 0)),
                # Bias: scalar in SMEM, no VMEM tile / DMA bookkeeping.
                pl.BlockSpec(memory_space=pltpu.MemorySpace.SMEM),
            ],
            out_specs=pl.BlockSpec((TB, OUT_FEATURES), lambda i: (i, 0)),
        ),
        compiler_params=pltpu.CompilerParams(
            # Batch axis is embarrassingly parallel (megacore sharding on v7x).
            dimension_semantics=("parallel",),
            vmem_limit_bytes=vmem_limit,
        ),
        cost_estimate=cost,
    )(x, w2d, b2d)

    return y


if __name__ == "__main__":
    key = jax.random.PRNGKey(0)
    kx, kw, kb, kx2, kx3 = jax.random.split(key, 5)

    # Deterministic init mimicking PyTorch's uniform(-1/sqrt(fan_in), 1/sqrt(fan_in)).
    bound = 1.0 / (IN_FEATURES ** 0.5)
    w = jax.random.uniform(kw, (OUT_FEATURES, IN_FEATURES), jnp.float32, -bound, bound)
    b = jax.random.uniform(kb, (OUT_FEATURES,), jnp.float32, -bound, bound)

    def check(x_in, **kwargs):
        y = jax.block_until_ready(linear_forward(x_in, w, b, **kwargs))
        y_ref = x_in.astype(jnp.float32) @ w.T + b
        assert y.shape == (x_in.shape[0], OUT_FEATURES)
        assert jnp.allclose(y.astype(jnp.float32), y_ref, atol=2e-4, rtol=1e-5)

    # Small batch (single full block).
    check(jax.random.normal(kx, (8, IN_FEATURES), jnp.float32))
    # Ragged batch: B not a multiple of the 8-row sublane tile, no padding pass.
    check(jax.random.normal(kx2, (10, IN_FEATURES), jnp.float32))
    # Multi-tile pipeline with balanced tiles and a ragged tail.
    check(jax.random.normal(kx3, (300, IN_FEATURES), jnp.float32), tb=128)

    print("KERNEL_OK")
</pallas_src>

<mosaic_0001>
module attributes {stable_mosaic.version = 11 : i64} {
  func.func @linear_kernel(%arg0: i32, %arg1: memref<8x784xf32, #tpu.memory_space<vmem>>, %arg2: memref<1x784xf32, #tpu.memory_space<vmem>>, %arg3: memref<1x1xf32, #tpu.memory_space<smem>>, %arg4: memref<8x1xf32, #tpu.memory_space<vmem>>) attributes {dimension_semantics = [#tpu.dimension_semantics<parallel>], iteration_bounds = array<i64: 1>, scalar_prefetch = 0 : i64, scratch_operands = 0 : i64, tpu.core_type = #tpu.core_type<tc>, window_params = [{transform_indices = @transform_0, window_bounds = array<i64: 8, 784>}, {pipeline_mode = #tpu.pipeline_mode<synchronous>, transform_indices = @transform_1, window_bounds = array<i64: 1, 784>}, {transform_indices = @transform_2, window_bounds = array<i64: 1, 1>}, {transform_indices = @transform_3, window_bounds = array<i64: 8, 1>}]} {
    %c0 = arith.constant 0 : index
    %c0_0 = arith.constant 0 : index
    %0 = vector.load %arg1[%c0, %c0_0] : memref<8x784xf32, #tpu.memory_space<vmem>>, vector<8x784xf32>
    %c0_1 = arith.constant 0 : index
    %c0_2 = arith.constant 0 : index
    %1 = vector.load %arg2[%c0_1, %c0_2] : memref<1x784xf32, #tpu.memory_space<vmem>>, vector<1x784xf32>
    %2 = vector.broadcast %1 : vector<1x784xf32> to vector<8x784xf32>
    %3 = arith.mulf %0, %2 : vector<8x784xf32>
    %cst = arith.constant dense<0.000000e+00> : vector<8xf32>
    %4 = vector.multi_reduction <add>, %3, %cst [1] : vector<8x784xf32> to vector<8xf32>
    %5 = vector.shape_cast %4 : vector<8xf32> to vector<8x1xf32>
    %c0_3 = arith.constant 0 : index
    %c0_4 = arith.constant 0 : index
    %6 = memref.load %arg3[%c0_3, %c0_4] : memref<1x1xf32, #tpu.memory_space<smem>>
    %7 = vector.broadcast %6 : f32 to vector<8x1xf32>
    %8 = arith.addf %5, %7 : vector<8x1xf32>
    %c0_5 = arith.constant 0 : index
    %c0_6 = arith.constant 0 : index
    %9 = vector.load %arg4[%c0_5, %c0_6] : memref<8x1xf32, #tpu.memory_space<vmem>>, vector<8x1xf32>
    tpu.vector_store %arg4[%c0_5, %c0_6], %8 {strides = array<i32>} : memref<8x1xf32, #tpu.memory_space<vmem>>, vector<8x1xf32>,
    return
  }
  func.func @transform_0(%arg0: i32) -> (i32, i32) {
    %c0_i32 = arith.constant 0 : i32
    %c0_i32_0 = arith.constant 0 : i32
    return %arg0, %c0_i32 : i32, i32
  }
  func.func @transform_1(%arg0: i32) -> (i32, i32) {
    %c0_i32 = arith.constant 0 : i32
    %c0_i32_0 = arith.constant 0 : i32
    %c0_i32_1 = arith.constant 0 : i32
    return %c0_i32, %c0_i32_0 : i32, i32
  }
  func.func @transform_2(%arg0: i32) -> (i32, i32) {
    %c0_i32 = arith.constant 0 : i32
    %c0_i32_0 = arith.constant 0 : i32
    %c0_i32_1 = arith.constant 0 : i32
    return %c0_i32, %c0_i32_0 : i32, i32
  }
  func.func @transform_3(%arg0: i32) -> (i32, i32) {
    %c0_i32 = arith.constant 0 : i32
    %c0_i32_0 = arith.constant 0 : i32
    return %arg0, %c0_i32 : i32, i32
  }
}

</mosaic_0001>

<llo_original>
// kernel: tpu_custom_call.1
$region0: #{tpu_custom_call.1}
  #allocation0 [shape = 'u32[]', space=smem, size = 0x4, offset = 0x4, fixed_abs, tag = 'smem constant byte address 0x4 - core index']
  #allocation1 [shape = 'u32[144,128]{1,0:T(1,128)}', space=vmem, size = 0x12000, scoped, tag = 'internal scratch']
  #allocation2 [shape = 'f32[1,1]{1,0:T(1,128)S(6)}', space=smem, size = 0x200, scoped, tag = 'scoped memory for tpu_custom_call.1']
  %s0 = inlined_call_operand.hbm [shape: f32[8,784], index: 0, kind: input, shape index: {}]
  %s1 = inlined_call_operand.vmem [shape: f32[1,784], index: 1, kind: input, shape index: {}]
  %s2 = inlined_call_operand.<no memory space> [shape: f32[1,1], index: 2, kind: input, shape index: {}]
  %s3 = inlined_call_operand.vmem [shape: f32[8,1], index: 3, kind: output, shape index: {}]
  %s4 = sld [smem:[#allocation0]]
  $region26: #{tpu_custom_call.1} parent=0
    _
  %s6 = ssub.s32 1, %s4
  %s7 = scalar_select 0, %s6, %s4
  %8 = sst [smem:[#allocation2]] %s2
  $region1: #{tpu_custom_call.1} parent=0
    #allocation3 [shape = 'u8[28672]{0}', space=vmem, size = 0x7000, scoped, tag = 'input window, operand 0, single buffered']
    #allocation4 [shape = 's32[1]{0}', space=sflag, size = 0x4, scoped, tag = 'scoped memory for tpu_custom_call.1']
    %9 = vsyncpa [#allocation4], 0
    // Predicated region
    $region2: #{tpu_custom_call.1} parent=1 // pred_check
      _
    $region3: #{tpu_custom_call.1} parent=1 // pred_check_branch
      %11 = sbr.rel (0) target = $region5
    $region4: #{tpu_custom_call.1} parent=1 // pred_region
      %s13 = ssub.s32 896, 896
      %14 = vsyncadd [#allocation4], %s13
      %s16 = sshll.u32 [#allocation3], 4
      %s17 = int_to_ptr.vmem [resolvable:$true] %s16
      %19 = dma.hbm_to_vmem [thread:$0]  %s0, 896, %s17, [#allocation4]
    $region5: #{tpu_custom_call.1} parent=1 // pred_fallthru
      _
    // Predicated region
    $region6: #{tpu_custom_call.1} parent=1 // pred_check
      _
    $region7: #{tpu_custom_call.1} parent=1 // pred_check_branch
      %21 = sbr.rel (0) target = $region9
    $region8: #{tpu_custom_call.1} parent=1 // pred_region
      _
    $region9: #{tpu_custom_call.1} parent=1 // pred_fallthru
      _
    // Predicated region
    $region10: #{tpu_custom_call.1} parent=1 // pred_check
      _
    $region11: #{tpu_custom_call.1} parent=1 // pred_check_branch
      %23 = sbr.rel (0) target = $region13
    $region12: #{tpu_custom_call.1} parent=1 // pred_region
      _
    $region13: #{tpu_custom_call.1} parent=1 // pred_fallthru
      _
    // Predicated region
    $region14: #{tpu_custom_call.1} parent=1 // pred_check
      _
    $region15: #{tpu_custom_call.1} parent=1 // pred_check_branch
      %25 = sbr.rel (0) target = $region17
    $region16: #{tpu_custom_call.1} parent=1 // pred_region
      %26 = dma.done [#allocation4], 896
    $region17: #{tpu_custom_call.1} parent=1 // pred_fallthru
      _
    %v27 = vld [vmem:[#allocation3] sm:$0xff]
    %v28 = vld [vmem:[#allocation3 + $0x8] sm:$0xff]
    %v29 = vld [vmem:[#allocation3 + $0x10] sm:$0xff]
    %v30 = vld [vmem:[#allocation3 + $0x18] sm:$0xff]
    %v31 = vld [vmem:[#allocation3 + $0x20] sm:$0xff]
    %v32 = vld [vmem:[#allocation3 + $0x28] sm:$0xff]
    %v33 = vld [vmem:[#allocation3 + $0x30] sm:$0xff]
    %v34 = vld [vmem:[%s1] sm:$0x7f]
    %v36 = vlaneseq
    %v37 = vshrl.u32 %v36, 7
    %v38 = vsub.s32 0, %v37
    %v39 = vrot.slane %v34, %v38
    %v40 = vlaneseq
    %v41 = vshrl.u32 %v40, 7
    %v42 = vsub.s32 1, %v41
    %v43 = vrot.slane %v34, %v42
    %v44 = vlaneseq
    %v45 = vshrl.u32 %v44, 7
    %v46 = vsub.s32 2, %v45
    %v47 = vrot.slane %v34, %v46
    %v48 = vlaneseq
    %v49 = vshrl.u32 %v48, 7
    %v50 = vsub.s32 3, %v49
    %v51 = vrot.slane %v34, %v50
    %v52 = vlaneseq
    %v53 = vshrl.u32 %v52, 7
    %v54 = vsub.s32 4, %v53
    %v55 = vrot.slane %v34, %v54
    %v56 = vlaneseq
    %v57 = vshrl.u32 %v56, 7
    %v58 = vsub.s32 5, %v57
    %v59 = vrot.slane %v34, %v58
    %v60 = vlaneseq
    %v61 = vshrl.u32 %v60, 7
    %v62 = vsub.s32 6, %v61
    %v63 = vrot.slane %v34, %v62
    %v71 = vmul.f32 %v27, %v39
    %v72 = vmul.f32 %v28, %v43
    %v73 = vmul.f32 %v29, %v47
    %v74 = vmul.f32 %v30, %v51
    %v75 = vmul.f32 %v31, %v55
    %v76 = vmul.f32 %v32, %v59
    %v77 = vmul.f32 %v33, %v63
    %v78 = vadd.f32 %v71, %v72
    %v79 = vadd.f32 %v78, %v73
    %v80 = vadd.f32 %v79, %v74
    %v81 = vadd.f32 %v80, %v75
    %v82 = vadd.f32 %v81, %v76
    %vm83 = vcmask 130048
    %v84 = vsel %vm83, %v77, 0.0
    %v85 = vadd.f32 %v82, %v84
    %86 = vadd.xlane.f32.xlu0 %v85
    %v87 = vpop.xlane.xlu0 %86
    %s88 = sld [smem:[#allocation2]]
    %v89 = vstv %s88
    %v90 = vadd.f32 %v87, %v89
    %vm91 = vcmask 7168
    %92 = vst.msk [vmem:[%s3] sm:$0xff] %vm91, %v90
    // Predicated region
    $region18: #{tpu_custom_call.1} parent=1 // pred_check
      _
    $region19: #{tpu_custom_call.1} parent=1 // pred_check_branch
      %94 = sbr.rel (0) target = $region21
    $region20: #{tpu_custom_call.1} parent=1 // pred_region
      _
    $region21: #{tpu_custom_call.1} parent=1 // pred_fallthru
      _
    // Predicated region
    $region22: #{tpu_custom_call.1} parent=1 // pred_check
      _
    $region23: #{tpu_custom_call.1} parent=1 // pred_check_branch
      %96 = sbr.rel (0) target = $region25
    $region24: #{tpu_custom_call.1} parent=1 // pred_region
      _
    $region25: #{tpu_custom_call.1} parent=1 // pred_fallthru
      _
    %97 = vsyncpa [#allocation4], 1

</llo_original>
